<compile_context>
chip_gen: v5e
topology: v5e:2x2
jax: 0.10.0
libtpu: 0.0.40
codegen_flags: <defaults>
</compile_context>

<pallas_src>
import functools

import jax
import jax.numpy as jnp
from jax.experimental import pallas as pl
from jax.experimental.pallas import tpu as pltpu

_LANE = 128
_SUBLANE = 8
_MAX_IN_BLOCK_BYTES = 8 * 1024 * 1024   # per (double-buffered) input block
_MAX_TILE_E = 1024
_L_CHUNK = 8                            # sublane chunk for the L reduction


def _round_up(x, m):
    return ((x + m - 1) // m) * m


def _vmem_limit(needed_bytes):
    # Headroom over the estimated footprint, capped well inside v7x's 64 MiB.
    return int(min(max(needed_bytes + (8 << 20), 32 << 20), 48 << 20))


def _pick_tile_e(E, max_te, sub):
    """E-tile: as big as the block budget allows, multiple of `sub`, and at
    least 2 blocks along the parallel E axis (both v7x TensorCores get work)."""
    if E <= sub:
        return E  # full-extent block is always a legal block shape
    tile_e = min(max_te, _MAX_TILE_E, _round_up(E, sub))
    tile_e = max(sub, (tile_e // sub) * sub)
    if pl.cdiv(E, tile_e) < 2:
        tile_e = max(sub, _round_up(pl.cdiv(E, 2), sub))
    return tile_e


# ---------------------------------------------------------------------------
# General path: (tile_e, tile_l, D) blocks; L blocked only for very long L.
# ---------------------------------------------------------------------------
def _sum_over_l(feat_ref, tile_l, valid=None):
    """Sum feat_ref over axis 1 in f32, in small sublane chunks so no
    full-tile f32 temporary is ever materialized.  `valid` (traced scalar, or
    None) zeroes rows with index >= valid (OOB L-tail rows)."""
    acc = None
    for j in range(0, tile_l, _L_CHUNK):
        ch = min(_L_CHUNK, tile_l - j)
        x = feat_ref[:, pl.ds(j, ch), :].astype(jnp.float32)
        if valid is not None:
            idx = jax.lax.broadcasted_iota(jnp.int32, (1, ch, 1), 1) + j
            x = jnp.where(idx < valid, x, 0.0)
        s = jnp.sum(x, axis=1)
        acc = s if acc is None else acc + s
    return acc


def _mean_kernel_single(feat_ref, out_ref, *, tile_l, inv_len):
    # Whole L in one block: no accumulator scratch, no masking needed.
    acc = _sum_over_l(feat_ref, tile_l)
    out_ref[...] = (acc * inv_len).astype(out_ref.dtype)


def _mean_kernel_acc(feat_ref, out_ref, acc_ref, *, tile_l, seq_len, inv_len,
                     mask_tail):
    l = pl.program_id(1)

    @pl.when(l == 0)
    def _():
        acc_ref[...] = jnp.zeros_like(acc_ref)

    valid = (seq_len - l * tile_l) if mask_tail else None
    acc_ref[...] += _sum_over_l(feat_ref, tile_l, valid=valid)

    @pl.when(l == pl.num_programs(1) - 1)
    def _():
        out_ref[...] = (acc_ref[...] * inv_len).astype(out_ref.dtype)


def _choose_tiles(E, L, D, itemsize, max_block_bytes, sub):
    d_pad = _round_up(D, _LANE)   # lanes actually occupied in VMEM

    def max_te(tl):
        row_bytes = _round_up(tl * itemsize, 32) * d_pad
        return max(1, max_block_bytes // row_bytes)

    tile_l = L
    if max_te(L) < 128 and L > _L_CHUNK:
        # Very long L: block it so the E tile (DMA size, store density) stays
        # big; the L tail block is masked in-kernel (no padding, no extra HBM).
        tile_l = _L_CHUNK
        while tile_l * 2 < L and max_te(tile_l * 2) >= 256:
            tile_l *= 2

    tile_e = _pick_tile_e(E, max_te(tile_l), sub)
    return tile_e, tile_l


def _mean_encoder_general(feat, max_block_bytes):
    E, L, D = feat.shape
    itemsize = jnp.dtype(feat.dtype).itemsize
    sub = max(_SUBLANE, 32 // itemsize)
    tile_e, tile_l = _choose_tiles(E, L, D, itemsize, max_block_bytes, sub)

    d_pad = _round_up(D, _LANE)
    in_block = tile_e * _round_up(tile_l * itemsize, 32) * d_pad
    out_block = tile_e * d_pad * itemsize
    tmp_block = tile_e * _L_CHUNK * d_pad * 4   # per-chunk f32 temporary
    inv_len = 1.0 / L

    if tile_l >= L:
        # Single L step: no scratch, no init/finalize.
        needed = 2 * in_block + 2 * out_block + tmp_block
        return pl.pallas_call(
            functools.partial(_mean_kernel_single, tile_l=L, inv_len=inv_len),
            out_shape=jax.ShapeDtypeStruct((E, D), feat.dtype),
            grid_spec=pltpu.PrefetchScalarGridSpec(
                num_scalar_prefetch=0,
                grid=(pl.cdiv(E, tile_e),),
                in_specs=[pl.BlockSpec((tile_e, L, D), lambda i: (i, 0, 0))],
                out_specs=pl.BlockSpec((tile_e, D), lambda i: (i, 0)),
            ),
            compiler_params=pltpu.CompilerParams(
                dimension_semantics=("parallel",),
                vmem_limit_bytes=_vmem_limit(needed),
            ),
        )(feat)

    # L blocked: accumulate into an f32 VMEM scratch across the L grid axis.
    acc_block = tile_e * d_pad * 4
    needed = 2 * in_block + 2 * out_block + acc_block + tmp_block
    mask_tail = (L % tile_l) != 0
    return pl.pallas_call(
        functools.partial(_mean_kernel_acc, tile_l=tile_l, seq_len=L,
                          inv_len=inv_len, mask_tail=mask_tail),
        out_shape=jax.ShapeDtypeStruct((E, D), feat.dtype),
        grid_spec=pltpu.PrefetchScalarGridSpec(
            num_scalar_prefetch=0,
            grid=(pl.cdiv(E, tile_e), pl.cdiv(L, tile_l)),
            in_specs=[pl.BlockSpec((tile_e, tile_l, D), lambda i, l: (i, l, 0))],
            out_specs=pl.BlockSpec((tile_e, D), lambda i, l: (i, 0)),
            scratch_shapes=[pltpu.VMEM((tile_e, D), jnp.float32)],
        ),
        compiler_params=pltpu.CompilerParams(
            dimension_semantics=("parallel", "arbitrary"),
            vmem_limit_bytes=_vmem_limit(needed),
        ),
    )(feat)


# ---------------------------------------------------------------------------
# Lane-packed path for small D: feat viewed as (E, L*D) so the input DMA and
# VMEM tile are lane-dense.  Reduction: sum the 128-lane-aligned chunks with
# plain VPU adds, then fold the 128//D partial segment sums with XLU rolls.
# ---------------------------------------------------------------------------
def _mean_kernel_packed(feat_ref, out_ref, *, num_chunks, seg_len, inv_len):
    # feat_ref: (tile_e, num_chunks * 128), lane-dense.
    acc = feat_ref[:, pl.ds(0, _LANE)].astype(jnp.float32)
    for c in range(1, num_chunks):
        acc = acc + feat_ref[:, pl.ds(c * _LANE, _LANE)].astype(jnp.float32)
    # acc holds 128//seg_len partial segment sums side by side; fold them.
    total = acc
    tmp = acc
    for _ in range(1, _LANE // seg_len):
        tmp = pltpu.roll(tmp, shift=_LANE - seg_len, axis=1)
        total = total + tmp
    out_ref[...] = (total[:, :seg_len] * inv_len).astype(out_ref.dtype)


def _mean_encoder_packed(feat, max_block_bytes):
    E, L, D = feat.shape
    itemsize = jnp.dtype(feat.dtype).itemsize
    sub = max(_SUBLANE, 32 // itemsize)
    LD = L * D
    feat2d = feat.reshape(E, LD)   # contiguous reshape: no data movement

    row_bytes = LD * itemsize
    tile_e = _pick_tile_e(E, max(1, max_block_bytes // row_bytes), sub)

    in_block = tile_e * LD * itemsize
    out_block = tile_e * _LANE * itemsize
    tmp_block = 3 * tile_e * _LANE * 4
    needed = 2 * in_block + 2 * out_block + tmp_block

    return pl.pallas_call(
        functools.partial(_mean_kernel_packed, num_chunks=LD // _LANE,
                          seg_len=D, inv_len=1.0 / L),
        out_shape=jax.ShapeDtypeStruct((E, D), feat.dtype),
        grid_spec=pltpu.PrefetchScalarGridSpec(
            num_scalar_prefetch=0,
            grid=(pl.cdiv(E, tile_e),),
            in_specs=[pl.BlockSpec((tile_e, LD), lambda i: (i, 0))],
            out_specs=pl.BlockSpec((tile_e, D), lambda i: (i, 0)),
        ),
        compiler_params=pltpu.CompilerParams(
            dimension_semantics=("parallel",),
            vmem_limit_bytes=_vmem_limit(needed),
        ),
    )(feat2d)


def mean_encoder(feat, *, max_block_bytes=_MAX_IN_BLOCK_BYTES):
    """Pallas implementation of MeanEncoder.forward: (E, L, d_in) -> (E, d_in)."""
    E, L, D = feat.shape
    itemsize = jnp.dtype(feat.dtype).itemsize
    LD = L * D
    use_packed = (
        D % _LANE != 0                    # general path already lane-dense otherwise
        and _LANE % D == 0                # D segments tile each 128-lane chunk
        and L % (_LANE // D) == 0         # flattened rows stay lane-aligned
        and LD // _LANE <= 64             # bounded unroll of the chunk adds
        and LD * itemsize <= max_block_bytes // _SUBLANE
    )
    if use_packed:
        return _mean_encoder_packed(feat, max_block_bytes)
    return _mean_encoder_general(feat, max_block_bytes)


if __name__ == "__main__":
    key = jax.random.PRNGKey(0)

    # Case 1: module-typical small shape (small D -> lane-packed path,
    # >=2 E blocks for 2-TC chips).
    E, L, d_in = 16, 8, 32
    feat = jax.random.normal(key, (E, L, d_in), dtype=jnp.float32)
    out = jax.block_until_ready(mean_encoder(feat))
    ref = jnp.mean(feat, axis=1)
    assert out.shape == (E, d_in)
    assert jnp.allclose(out, ref, atol=1e-5, rtol=1e-5)

    # Case 2: lane-dense D, E not divisible by the tile (partial boundary
    # block, no padding), single-L-step general path.
    E2, L2, d2 = 20, 5, 128
    feat2 = jax.random.normal(jax.random.PRNGKey(0), (E2, L2, d2),
                              dtype=jnp.float32)
    out2 = jax.block_until_ready(mean_encoder(feat2))
    ref2 = jnp.mean(feat2, axis=1)
    assert out2.shape == (E2, d2)
    assert jnp.allclose(out2, ref2, atol=1e-5, rtol=1e-5)

    # Case 3: force the L-blocked accumulator path (tiny block budget) to
    # exercise the in-kernel L-tail masking with a non-divisible L.
    E3, L3, d3 = 16, 20, 128
    feat3 = jax.random.normal(jax.random.PRNGKey(0), (E3, L3, d3),
                              dtype=jnp.float32)
    out3 = jax.block_until_ready(mean_encoder(feat3, max_block_bytes=16 * 1024))
    ref3 = jnp.mean(feat3, axis=1)
    assert out3.shape == (E3, d3)
    assert jnp.allclose(out3, ref3, atol=1e-5, rtol=1e-5)

    print("KERNEL_OK")
</pallas_src>

<mosaic_0001>
module attributes {stable_mosaic.version = 11 : i64} {
  func.func @_mean_kernel_packed(%arg0: i32, %arg1: memref<8x256xf32, #tpu.memory_space<vmem>>, %arg2: memref<8x32xf32, #tpu.memory_space<vmem>>) attributes {dimension_semantics = [#tpu.dimension_semantics<parallel>], iteration_bounds = array<i64: 2>, scalar_prefetch = 0 : i64, scratch_operands = 0 : i64, tpu.core_type = #tpu.core_type<tc>, window_params = [{transform_indices = @transform_0, window_bounds = array<i64: 8, 256>}, {transform_indices = @transform_1, window_bounds = array<i64: 8, 32>}]} {
    %c0 = arith.constant 0 : index
    %c0_0 = arith.constant 0 : index
    %0 = vector.load %arg1[%c0, %c0_0] : memref<8x256xf32, #tpu.memory_space<vmem>>, vector<8x128xf32>
    %c0_1 = arith.constant 0 : index
    %c128 = arith.constant 128 : index
    %1 = vector.load %arg1[%c0_1, %c128] : memref<8x256xf32, #tpu.memory_space<vmem>>, vector<8x128xf32>
    %2 = arith.addf %0, %1 : vector<8x128xf32>
    %c96_i32 = arith.constant 96 : i32
    %3 = tpu.dynamic_rotate %2 by %c96_i32 dim 1 : vector<8x128xf32>, i32 -> vector<8x128xf32>
    %4 = arith.addf %2, %3 : vector<8x128xf32>
    %c96_i32_2 = arith.constant 96 : i32
    %5 = tpu.dynamic_rotate %3 by %c96_i32_2 dim 1 : vector<8x128xf32>, i32 -> vector<8x128xf32>
    %6 = arith.addf %4, %5 : vector<8x128xf32>
    %c96_i32_3 = arith.constant 96 : i32
    %7 = tpu.dynamic_rotate %5 by %c96_i32_3 dim 1 : vector<8x128xf32>, i32 -> vector<8x128xf32>
    %8 = arith.addf %6, %7 : vector<8x128xf32>
    %9 = vector.extract_strided_slice %8 {offsets = [0, 0], sizes = [8, 32], strides = [1, 1]} : vector<8x128xf32> to vector<8x32xf32>
    %cst = arith.constant 1.250000e-01 : f32
    %10 = vector.broadcast %cst : f32 to vector<8x32xf32>
    %11 = arith.mulf %9, %10 : vector<8x32xf32>
    %c0_4 = arith.constant 0 : index
    %c0_5 = arith.constant 0 : index
    %12 = vector.load %arg2[%c0_4, %c0_5] : memref<8x32xf32, #tpu.memory_space<vmem>>, vector<8x32xf32>
    tpu.vector_store %arg2[%c0_4, %c0_5], %11 {strides = array<i32>} : memref<8x32xf32, #tpu.memory_space<vmem>>, vector<8x32xf32>,
    return
  }
  func.func @transform_0(%arg0: i32) -> (i32, i32) {
    %c0_i32 = arith.constant 0 : i32
    %c0_i32_0 = arith.constant 0 : i32
    return %arg0, %c0_i32 : i32, i32
  }
  func.func @transform_1(%arg0: i32) -> (i32, i32) {
    %c0_i32 = arith.constant 0 : i32
    %c0_i32_0 = arith.constant 0 : i32
    return %arg0, %c0_i32 : i32, i32
  }
}

</mosaic_0001>

<llo_original>
// kernel: tpu_custom_call.1
$region0: #{tpu_custom_call.1}
  #allocation0 [shape = 'u32[]', space=smem, size = 0x4, offset = 0x4, fixed_abs, tag = 'smem constant byte address 0x4 - core index']
  #allocation1 [shape = 'u32[72,128]{1,0:T(1,128)}', space=vmem, size = 0x9000, scoped, tag = 'internal scratch']
  %s0 = inlined_call_operand.hbm [shape: f32[16,256], index: 0, kind: input, shape index: {}]
  %s1 = inlined_call_operand.hbm [shape: f32[16,32], index: 1, kind: output, shape index: {}]
  %s2 = sld [smem:[#allocation0]]
  $region41: #{tpu_custom_call.1} parent=0
    _
  %s4 = ssub.s32 1, %s2
  %s5 = scalar_select 0, %s4, %s2
  $region1: #{tpu_custom_call.1} parent=0
    #allocation2 [shape = 'u8[16384]{0}', space=vmem, size = 0x4000, scoped, tag = 'input window, operand 0']
    #allocation3 [shape = 's32[2]{0}', space=sflag, size = 0x8, scoped, tag = 'scoped memory for tpu_custom_call.1']
    #allocation4 [shape = 's32[2]{0}', space=sflag, size = 0x8, scoped, tag = 'scoped memory for tpu_custom_call.1']
    #allocation5 [shape = 'u8[8192]{0}', space=vmem, size = 0x2000, scoped, tag = 'output window, operand 0']
    %6 = vsyncpa [#allocation3], 0
    %s7 = scalar_lea.sflag [#allocation3], 1
    %8 = vsyncpa %s7, 0
    %9 = vsyncpa [#allocation4], 0
    %s10 = scalar_lea.sflag [#allocation4], 1
    %11 = vsyncpa %s10, 0
    loop: start=0, step=1, limit=4
    $region2: #{tpu_custom_call.1} parent=1 // loop_pre_header
      _
    $region3: #{tpu_custom_call.1} parent=1 // loop_header
      %s13 = sphi 0, %s17
      %p14 = scmp.ge.s32.totalorder %s13, 4
      %s23 = sphi 0, %s25
      %s26 = sphi 0, %s23
      %s27 = sphi 0, %s26
      %s43 = sphi 0, %s27
      %s49 = sphi 0, %s51
      %s52 = sphi 0, %s49
      %s53 = sphi 0, %s52
      %s69 = sphi 0, %s53
    $region4: #{tpu_custom_call.1} parent=1 // loop_header_branch
      %16 = sbr.rel (%p14) target = $region8
    $region5: #{tpu_custom_call.1} parent=1 // loop_body
      %s18 = ssub.s32 %s13, 1
      %s19 = ssub.s32 %s13, 2
      %s20 = sadd.s32 %s13, 1
      %s21 = ssub.s32 %s13, %s20
      %p22 = scmp.eq.s32.totalorder %s21, 0
      %s24 = sadd.s32 %s23, 1
      %s25 = scalar_select %p22, %s23, %s24
      %p28 = pneg %p22
      %p29 = scmp.eq.s32.totalorder %s13, 1
      %p30 = por %p28, %p29
      %p31 = scmp.ne.s32.totalorder %s23, %s26
      %p32 = scmp.eq.s32.totalorder %s13, 0
      %p33 = por %p31, %p32
      %p34 = scmp.ne.s32.totalorder %s23, %s26
      %p35 = scmp.eq.s32.totalorder %s18, 1
      %p36 = por %p34, %p35
      %p37 = scmp.ne.s32.totalorder %s26, %s27
      %p38 = scmp.eq.s32.totalorder %s18, 0
      %p39 = por %p37, %p38
      %p40 = scmp.ne.s32.totalorder %s26, %s27
      %p41 = scmp.eq.s32.totalorder %s19, 1
      %p42 = por %p40, %p41
      %p44 = scmp.ne.s32.totalorder %s27, %s43
      %p45 = scmp.eq.s32.totalorder %s19, 0
      %p46 = por %p44, %p45
      %s47 = ssub.s32 %s13, %s20
      %p48 = scmp.eq.s32.totalorder %s47, 0
      %s50 = sadd.s32 %s49, 1
      %s51 = scalar_select %p48, %s49, %s50
      %p54 = pneg %p48
      %p55 = scmp.eq.s32.totalorder %s13, 1
      %p56 = por %p54, %p55
      %p57 = scmp.ne.s32.totalorder %s49, %s52
      %p58 = scmp.eq.s32.totalorder %s13, 0
      %p59 = por %p57, %p58
      %p60 = scmp.ne.s32.totalorder %s49, %s52
      %p61 = scmp.eq.s32.totalorder %s18, 1
      %p62 = por %p60, %p61
      %p63 = scmp.ne.s32.totalorder %s52, %s53
      %p64 = scmp.eq.s32.totalorder %s18, 0
      %p65 = por %p63, %p64
      %p66 = scmp.ne.s32.totalorder %s52, %s53
      %p67 = scmp.eq.s32.totalorder %s19, 1
      %p68 = por %p66, %p67
      %p70 = scmp.ne.s32.totalorder %s53, %s69
      %p71 = scmp.eq.s32.totalorder %s19, 0
      %p72 = por %p70, %p71
      %p73 = scmp.le.s32.totalorder 1, %s13
      %p74 = scmp.lt.s32.totalorder %s13, 3
      %p75 = pnand %p73, %p74
      %p76 = pneg %p75
      // Predicated region
      $region9: #{tpu_custom_call.1} parent=5 // pred_check
        _
      $region10: #{tpu_custom_call.1} parent=5 // pred_check_branch
        %78 = sbr.rel (%p75) target = $region12
      $region11: #{tpu_custom_call.1} parent=5 // pred_region
        %s79 = ssub.s32 %s13, 1
      $region12: #{tpu_custom_call.1} parent=5 // pred_fallthru
        _
      %p80 = scmp.lt.s32.totalorder %s13, 2
      // Predicated region
      $region13: #{tpu_custom_call.1} parent=5 // pred_check
        %p81 = pneg %p80
      $region14: #{tpu_custom_call.1} parent=5 // pred_check_branch
        %83 = sbr.rel (%p81) target = $region16
      $region15: #{tpu_custom_call.1} parent=5 // pred_region
        // Predicated region
        $region17: #{tpu_custom_call.1} parent=15 // pred_check
          %p84 = pneg %p33
        $region18: #{tpu_custom_call.1} parent=15 // pred_check_branch
          %86 = sbr.rel (%p84) target = $region20
        $region19: #{tpu_custom_call.1} parent=15 // pred_region
          %s87 = sand.u32 %s23, 1
          %s88 = scalar_lea.sflag [#allocation3], %s87
          %s89 = sand.u32 %s23, 1
          %s90 = smul.addr %s89, 16
          %s91 = scalar_lea.vmem [#allocation2], %s90
          %93 = vsyncadd %s88, 0
          %s94 = smul.addr %s13, 2
          %s95 = smul.addr %s94, 8
          %s96 = scalar_lea.hbm %s0, %s95
          %s98 = sshll.u32 %s96, 4
          %s99 = int_to_ptr.hbm [resolvable:$true] %s98
          %s100 = sshll.u32 %s91, 4
          %s101 = int_to_ptr.vmem [resolvable:$true] %s100
          %103 = dma.hbm_to_vmem [thread:$0]  %s99, 256, %s101, %s88
        $region20: #{tpu_custom_call.1} parent=15 // pred_fallthru
          _
      $region16: #{tpu_custom_call.1} parent=5 // pred_fallthru
        _
      %p104 = scmp.le.s32.totalorder 1, %s13
      %p105 = scmp.lt.s32.totalorder %s13, 3
      %p106 = pnand %p104, %p105
      %p107 = pneg %p106
      // Predicated region
      $region21: #{tpu_custom_call.1} parent=5 // pred_check
        _
      $region22: #{tpu_custom_call.1} parent=5 // pred_check_branch
        %109 = sbr.rel (%p106) target = $region24
      $region23: #{tpu_custom_call.1} parent=5 // pred_region
        %s110 = ssub.s32 %s13, 1
        %s111 = sand.u32 %s26, 1
        %s112 = scalar_lea.sflag [#allocation3], %s111
        %s113 = sand.u32 %s26, 1
        %s114 = smul.addr %s113, 16
        %s115 = scalar_lea.vmem [#allocation2], %s114
        // Predicated region
        $region25: #{tpu_custom_call.1} parent=23 // pred_check
          %p116 = pneg %p39
        $region26: #{tpu_custom_call.1} parent=23 // pred_check_branch
          %118 = sbr.rel (%p116) target = $region28
        $region27: #{tpu_custom_call.1} parent=23 // pred_region
          %120 = dma.done %s112, 256
        $region28: #{tpu_custom_call.1} parent=23 // pred_fallthru
          _
        %s121 = sand.u32 %s26, 1
        %s122 = scalar_lea.sflag [#allocation3], %s121
        %s123 = sand.u32 %s26, 1
        %s124 = smul.addr %s123, 16
        %s125 = scalar_lea.vmem [#allocation2], %s124
        %p126 = pneg %p39
        %p127 = pneg %p36
        %p128 = pneg %p65
        %p129 = pneg %p62
        %s130 = sand.u32 %s52, 1
        %s131 = scalar_lea.sflag [#allocation4], %s130
        %s132 = sand.u32 %s52, 1
        %s133 = smul.addr %s132, 8
        %s134 = scalar_lea.vmem [#allocation5], %s133
        %v135 = vld [vmem:[%s115] sm:$0xff]
        %v136 = vld [vmem:[%s115 + $0x8] sm:$0xff]
        %v137 = vadd.f32 %v135, %v136
        %138 = vrot.lane.b32.xlu0 %v137, 96
        %v139 = vpop.permute.xlu0 %138
        %v140 = vadd.f32 %v137, %v139
        %141 = vrot.lane.b32.xlu0 %v139, 96
        %v142 = vpop.permute.xlu0 %141
        %v143 = vadd.f32 %v140, %v142
        %144 = vrot.lane.b32.xlu0 %v142, 96
        %v145 = vpop.permute.xlu0 %144
        %v146 = vadd.f32 %v143, %v145
        %v147 = vmul.f32 %v146, 0.125
        %vm148 = vcmask 261120
        %149 = vst.msk [vmem:[%s134] sm:$0xff] %vm148, %v147
        %s150 = sand.u32 %s52, 1
        %s151 = scalar_lea.sflag [#allocation4], %s150
        %s152 = sand.u32 %s52, 1
        %s153 = smul.addr %s152, 8
        %s154 = scalar_lea.vmem [#allocation5], %s153
        // Predicated region
        $region29: #{tpu_custom_call.1} parent=23 // pred_check
          %p155 = pneg %p62
        $region30: #{tpu_custom_call.1} parent=23 // pred_check_branch
          %157 = sbr.rel (%p155) target = $region32
        $region31: #{tpu_custom_call.1} parent=23 // pred_region
          %159 = vsyncadd %s151, 0
          %s160 = smul.addr %s18, 8
          %s161 = scalar_lea.hbm %s1, %s160
          %s163 = sshll.u32 %s154, 4
          %s164 = int_to_ptr.vmem [resolvable:$true] %s163
          %s165 = sshll.u32 %s161, 4
          %s166 = int_to_ptr.hbm [resolvable:$true] %s165
          %168 = dma.vmem_to_hbm [thread:$0]  %s164, 128, %s166, %s151
        $region32: #{tpu_custom_call.1} parent=23 // pred_fallthru
          _
      $region24: #{tpu_custom_call.1} parent=5 // pred_fallthru
        _
      %p169 = scmp.le.s32.totalorder 2, %s13
      // Predicated region
      $region33: #{tpu_custom_call.1} parent=5 // pred_check
        %p170 = pneg %p169
      $region34: #{tpu_custom_call.1} parent=5 // pred_check_branch
        %172 = sbr.rel (%p170) target = $region36
      $region35: #{tpu_custom_call.1} parent=5 // pred_region
        %s173 = ssub.s32 %s13, 2
        // Predicated region
        $region37: #{tpu_custom_call.1} parent=35 // pred_check
          %p174 = pneg %p68
        $region38: #{tpu_custom_call.1} parent=35 // pred_check_branch
          %176 = sbr.rel (%p174) target = $region40
        $region39: #{tpu_custom_call.1} parent=35 // pred_region
          %s177 = sand.u32 %s53, 1
          %s178 = scalar_lea.sflag [#allocation4], %s177
          %s179 = sand.u32 %s53, 1
          %s180 = smul.addr %s179, 8
          %s181 = scalar_lea.vmem [#allocation5], %s180
          %183 = dma.done %s178, 128
        $region40: #{tpu_custom_call.1} parent=35 // pred_fallthru
          _
      $region36: #{tpu_custom_call.1} parent=5 // pred_fallthru
        _
    $region6: #{tpu_custom_call.1} parent=1 // loop_footer
      %s17 = sadd.s32 1, %s13
    $region7: #{tpu_custom_call.1} parent=1 // loop_footer_branch
      %12 = sbr.rel target = $region3
    $region8: #{tpu_custom_call.1} parent=1 // loop_exit
      _
    %184 = vsyncpa [#allocation3], 1
    %s185 = scalar_lea.sflag [#allocation3], 1
    %186 = vsyncpa %s185, 1
    %187 = vsyncpa [#allocation4], 1
    %s188 = scalar_lea.sflag [#allocation4], 1
    %189 = vsyncpa %s188, 1

</llo_original>
